<compile_context>
chip_gen: v5e
topology: v5e:2x2
jax: 0.10.0
libtpu: 0.0.40
codegen_flags: <defaults>
</compile_context>

<pallas_src>
import math
import jax
import jax.numpy as jnp
from jax import lax
from jax.experimental import pallas as pl
from jax.experimental.pallas import tpu as pltpu


def _encoder_block_kernel(num_heads, dk, hidden, eps=1e-5):
    scale = 1.0 / math.sqrt(dk)
    gelu_c = math.sqrt(2.0 / math.pi)

    def layer_norm(t, gamma, beta):
        mu = jnp.mean(t, axis=-1, keepdims=True)
        var = jnp.mean(jnp.square(t - mu), axis=-1, keepdims=True)
        return (t - mu) * lax.rsqrt(var + eps) * gamma + beta

    def gelu(t):  # tanh approximation (see TODO above)
        return 0.5 * t * (1.0 + jnp.tanh(gelu_c * (t + 0.044715 * t * t * t)))

    def kernel(x_ref, ln_g_ref, ln_b_ref, wqkv_ref, bqkv_ref,
               w1_ref, b1_ref, w2_ref, b2_ref,
               out_ref, attn_ref, acc_ref):
        dt = x_ref.dtype
        x = x_ref[0].astype(jnp.float32)                 # (S, H)
        gamma = ln_g_ref[...].astype(jnp.float32)        # (1, H)
        beta = ln_b_ref[...].astype(jnp.float32)         # (1, H)

        # ---- MHA on LayerNorm(x): fused QKV projection (single MXU pass) ----
        xn = layer_norm(x, gamma, beta).astype(dt)
        qkv = jnp.dot(xn, wqkv_ref[...],
                      preferred_element_type=jnp.float32) + bqkv_ref[...]  # (S, 3H)

        for h in range(num_heads):   # static unroll; num_heads is small
            lo = h * dk
            qh = qkv[:, lo:lo + dk]                                  # (S, dk)
            kh = qkv[:, hidden + lo:hidden + lo + dk]                # (S, dk)
            vh = qkv[:, 2 * hidden + lo:2 * hidden + lo + dk]        # (S, dk)

            # scores: contract dk dims directly (no explicit transpose)
            s = lax.dot_general(qh, kh, (((1,), (1,)), ((), ())),
                                preferred_element_type=jnp.float32) * scale  # (S, S)
            s = s - jnp.max(s, axis=-1, keepdims=True)
            p = jnp.exp(s)
            p = p * pl.reciprocal(jnp.sum(p, axis=-1, keepdims=True), approx=True)

            attn_ref[0, h] = p.astype(attn_ref.dtype)                # (S, S)
            # accumulate head output into VMEM scratch; store out_ref once later
            acc_ref[:, lo:lo + dk] = jnp.dot(
                p.astype(dt), vh.astype(dt),
                preferred_element_type=jnp.float32)                  # (S, dk)

        # ---- residual + LayerNorm + MLP + residual ----
        x1 = x + acc_ref[...]                                        # (S, H) f32
        n2 = layer_norm(x1, gamma, beta).astype(dt)
        hmid = jnp.dot(n2, w1_ref[...],
                       preferred_element_type=jnp.float32) + b1_ref[...]     # (S, I)
        hmid = gelu(hmid)
        y = jnp.dot(hmid.astype(dt), w2_ref[...],
                    preferred_element_type=jnp.float32) + b2_ref[...]        # (S, H)
        out_ref[0] = (x1 + y).astype(out_ref.dtype)   # single lane-dense store

    return kernel


def transformer_encoder_block(x, params, num_heads):
    """x: (B, S, H). params use PyTorch conventions (W:(out,in), b:(out,))."""
    B, S, H = x.shape
    dk = H // num_heads
    I = params["w1"].shape[0]

    # Fuse QKV weights/biases; pre-transpose to column-major-in (in, out) form.
    wqkv_t = jnp.concatenate(
        [params["wq"].T, params["wk"].T, params["wv"].T], axis=1)     # (H, 3H)
    bqkv = jnp.concatenate(
        [params["bq"], params["bk"], params["bv"]]).reshape(1, 3 * H)
    w1_t = params["w1"].T                                             # (H, I)
    b1 = params["b1"].reshape(1, I)
    w2_t = params["w2"].T                                             # (I, H)
    b2 = params["b2"].reshape(1, H)
    ln_g = params["ln_g"].reshape(1, H)
    ln_b = params["ln_b"].reshape(1, H)

    kernel = _encoder_block_kernel(num_heads, dk, H)
    const2d = lambda b: (0, 0)

    out, attn = pl.pallas_call(
        kernel,
        out_shape=(
            jax.ShapeDtypeStruct((B, S, H), x.dtype),
            jax.ShapeDtypeStruct((B, num_heads, S, S), x.dtype),
        ),
        grid_spec=pltpu.PrefetchScalarGridSpec(
            num_scalar_prefetch=0,
            grid=(B,),
            in_specs=[
                pl.BlockSpec((1, S, H), lambda b: (b, 0, 0)),   # x
                pl.BlockSpec((1, H), const2d),                  # LayerNorm gamma
                pl.BlockSpec((1, H), const2d),                  # LayerNorm beta
                pl.BlockSpec((H, 3 * H), const2d),              # fused Wqkv^T
                pl.BlockSpec((1, 3 * H), const2d),              # fused bias qkv
                pl.BlockSpec((H, I), const2d),                  # fc1 W^T
                pl.BlockSpec((1, I), const2d),                  # fc1 b
                pl.BlockSpec((I, H), const2d),                  # fc2 W^T
                pl.BlockSpec((1, H), const2d),                  # fc2 b
            ],
            out_specs=[
                pl.BlockSpec((1, S, H), lambda b: (b, 0, 0)),
                pl.BlockSpec((1, num_heads, S, S), lambda b: (b, 0, 0, 0)),
            ],
            scratch_shapes=[pltpu.VMEM((S, H), jnp.float32)],   # head accumulator
        ),
        compiler_params=pltpu.CompilerParams(
            dimension_semantics=("parallel",),
            vmem_limit_bytes=32 * 1024 * 1024,
        ),
    )(x, ln_g, ln_b, wqkv_t, bqkv, w1_t, b1, w2_t, b2)

    return out, attn


def reference_block(x, params, num_heads, eps=1e-5):
    """Pure-JAX reference mirroring the PyTorch forward in eval mode."""
    B, S, H = x.shape
    dk = H // num_heads

    def layer_norm(t):
        mu = jnp.mean(t, axis=-1, keepdims=True)
        var = jnp.mean(jnp.square(t - mu), axis=-1, keepdims=True)
        return (t - mu) / jnp.sqrt(var + eps) * params["ln_g"] + params["ln_b"]

    def gelu(t):  # same tanh approximation as the kernel
        c = math.sqrt(2.0 / math.pi)
        return 0.5 * t * (1.0 + jnp.tanh(c * (t + 0.044715 * t ** 3)))

    n1 = layer_norm(x)
    q = n1 @ params["wq"].T + params["bq"]
    k = n1 @ params["wk"].T + params["bk"]
    v = n1 @ params["wv"].T + params["bv"]
    q = q.reshape(B, S, num_heads, dk).transpose(0, 2, 1, 3)
    k = k.reshape(B, S, num_heads, dk).transpose(0, 2, 1, 3)
    v = v.reshape(B, S, num_heads, dk).transpose(0, 2, 1, 3)
    s = jnp.einsum("bhqd,bhkd->bhqk", q, k) / math.sqrt(dk)
    p = jax.nn.softmax(s, axis=-1)
    o = jnp.einsum("bhqk,bhkd->bhqd", p, v).transpose(0, 2, 1, 3).reshape(B, S, H)
    x1 = x + o
    n2 = layer_norm(x1)
    m = gelu(n2 @ params["w1"].T + params["b1"]) @ params["w2"].T + params["b2"]
    return x1 + m, p


if __name__ == "__main__":
    B, S, H, num_heads = 2, 8, 32, 4
    I = 4 * H

    key = jax.random.PRNGKey(0)
    ks = jax.random.split(key, 13)
    x = jax.random.normal(ks[0], (B, S, H), dtype=jnp.float32)

    bh = 1.0 / math.sqrt(H)
    bi = 1.0 / math.sqrt(I)
    init = lambda k, shp, b: jax.random.uniform(k, shp, jnp.float32, -b, b)
    params = {
        "ln_g": 1.0 + 0.1 * jax.random.normal(ks[1], (H,), jnp.float32),
        "ln_b": 0.1 * jax.random.normal(ks[2], (H,), jnp.float32),
        "wq": init(ks[3], (H, H), bh), "bq": init(ks[4], (H,), bh),
        "wk": init(ks[5], (H, H), bh), "bk": init(ks[6], (H,), bh),
        "wv": init(ks[7], (H, H), bh), "bv": init(ks[8], (H,), bh),
        "w1": init(ks[9], (I, H), bh), "b1": init(ks[10], (I,), bh),
        "w2": init(ks[11], (H, I), bi), "b2": init(ks[12], (H,), bi),
    }

    out, attn = transformer_encoder_block(x, params, num_heads)
    out = jax.block_until_ready(out)
    attn = jax.block_until_ready(attn)

    out_ref, attn_ref = reference_block(x, params, num_heads)
    assert out.shape == (B, S, H) and attn.shape == (B, num_heads, S, S)
    # tolerances account for approx-reciprocal softmax denominator
    assert jnp.allclose(attn, attn_ref, atol=1e-3, rtol=1e-3), \
        float(jnp.max(jnp.abs(attn - attn_ref)))
    assert jnp.allclose(out, out_ref, atol=3e-3, rtol=3e-3), \
        float(jnp.max(jnp.abs(out - out_ref)))

    print("KERNEL_OK")
</pallas_src>

<mosaic_0001>
module attributes {stable_mosaic.version = 11 : i64} {
  func.func @kernel(%arg0: i32, %arg1: memref<1x8x32xf32, #tpu.memory_space<vmem>>, %arg2: memref<1x32xf32, #tpu.memory_space<vmem>>, %arg3: memref<1x32xf32, #tpu.memory_space<vmem>>, %arg4: memref<32x96xf32, #tpu.memory_space<vmem>>, %arg5: memref<1x96xf32, #tpu.memory_space<vmem>>, %arg6: memref<32x128xf32, #tpu.memory_space<vmem>>, %arg7: memref<1x128xf32, #tpu.memory_space<vmem>>, %arg8: memref<128x32xf32, #tpu.memory_space<vmem>>, %arg9: memref<1x32xf32, #tpu.memory_space<vmem>>, %arg10: memref<1x8x32xf32, #tpu.memory_space<vmem>>, %arg11: memref<1x4x8x8xf32, #tpu.memory_space<vmem>>, %arg12: memref<8x32xf32, #tpu.memory_space<vmem>>) attributes {dimension_semantics = [#tpu.dimension_semantics<parallel>], iteration_bounds = array<i64: 2>, scalar_prefetch = 0 : i64, scratch_operands = 1 : i64, tpu.core_type = #tpu.core_type<tc>, window_params = [{transform_indices = @transform_0, window_bounds = array<i64: 1, 8, 32>}, {pipeline_mode = #tpu.pipeline_mode<synchronous>, transform_indices = @transform_1, window_bounds = array<i64: 1, 32>}, {pipeline_mode = #tpu.pipeline_mode<synchronous>, transform_indices = @transform_2, window_bounds = array<i64: 1, 32>}, {pipeline_mode = #tpu.pipeline_mode<synchronous>, transform_indices = @transform_3, window_bounds = array<i64: 32, 96>}, {pipeline_mode = #tpu.pipeline_mode<synchronous>, transform_indices = @transform_4, window_bounds = array<i64: 1, 96>}, {pipeline_mode = #tpu.pipeline_mode<synchronous>, transform_indices = @transform_5, window_bounds = array<i64: 32, 128>}, {pipeline_mode = #tpu.pipeline_mode<synchronous>, transform_indices = @transform_6, window_bounds = array<i64: 1, 128>}, {pipeline_mode = #tpu.pipeline_mode<synchronous>, transform_indices = @transform_7, window_bounds = array<i64: 128, 32>}, {pipeline_mode = #tpu.pipeline_mode<synchronous>, transform_indices = @transform_8, window_bounds = array<i64: 1, 32>}, {transform_indices = @transform_9, window_bounds = array<i64: 1, 8, 32>}, {transform_indices = @transform_10, window_bounds = array<i64: 1, 4, 8, 8>}]} {
    %c0 = arith.constant 0 : index
    %c0_0 = arith.constant 0 : index
    %c0_1 = arith.constant 0 : index
    %0 = vector.load %arg1[%c0, %c0_0, %c0_1] : memref<1x8x32xf32, #tpu.memory_space<vmem>>, vector<1x8x32xf32>
    %1 = vector.shape_cast %0 : vector<1x8x32xf32> to vector<8x32xf32>
    %c0_2 = arith.constant 0 : index
    %c0_3 = arith.constant 0 : index
    %2 = vector.load %arg2[%c0_2, %c0_3] : memref<1x32xf32, #tpu.memory_space<vmem>>, vector<1x32xf32>
    %c0_4 = arith.constant 0 : index
    %c0_5 = arith.constant 0 : index
    %3 = vector.load %arg3[%c0_4, %c0_5] : memref<1x32xf32, #tpu.memory_space<vmem>>, vector<1x32xf32>
    %cst = arith.constant dense<0.000000e+00> : vector<8xf32>
    %4 = vector.multi_reduction <add>, %1, %cst [1] : vector<8x32xf32> to vector<8xf32>
    %5 = vector.shape_cast %4 : vector<8xf32> to vector<8x1xf32>
    %cst_6 = arith.constant 3.200000e+01 : f32
    %6 = vector.broadcast %cst_6 : f32 to vector<8x1xf32>
    %7 = arith.divf %5, %6 : vector<8x1xf32>
    %8 = vector.broadcast %7 : vector<8x1xf32> to vector<8x32xf32>
    %9 = arith.subf %1, %8 : vector<8x32xf32>
    %10 = arith.mulf %9, %9 : vector<8x32xf32>
    %cst_7 = arith.constant dense<0.000000e+00> : vector<8xf32>
    %11 = vector.multi_reduction <add>, %10, %cst_7 [1] : vector<8x32xf32> to vector<8xf32>
    %12 = vector.shape_cast %11 : vector<8xf32> to vector<8x1xf32>
    %cst_8 = arith.constant 3.200000e+01 : f32
    %13 = vector.broadcast %cst_8 : f32 to vector<8x1xf32>
    %14 = arith.divf %12, %13 : vector<8x1xf32>
    %15 = vector.broadcast %7 : vector<8x1xf32> to vector<8x32xf32>
    %16 = arith.subf %1, %15 : vector<8x32xf32>
    %cst_9 = arith.constant 9.99999974E-6 : f32
    %17 = vector.broadcast %cst_9 : f32 to vector<8x1xf32>
    %18 = arith.addf %14, %17 : vector<8x1xf32>
    %19 = math.rsqrt %18 : vector<8x1xf32>
    %20 = vector.broadcast %19 : vector<8x1xf32> to vector<8x32xf32>
    %21 = arith.mulf %16, %20 : vector<8x32xf32>
    %22 = vector.broadcast %2 : vector<1x32xf32> to vector<8x32xf32>
    %23 = arith.mulf %21, %22 : vector<8x32xf32>
    %24 = vector.broadcast %3 : vector<1x32xf32> to vector<8x32xf32>
    %25 = arith.addf %23, %24 : vector<8x32xf32>
    %c0_10 = arith.constant 0 : index
    %c0_11 = arith.constant 0 : index
    %26 = vector.load %arg4[%c0_10, %c0_11] : memref<32x96xf32, #tpu.memory_space<vmem>>, vector<32x96xf32>
    %cst_12 = arith.constant dense<0.000000e+00> : vector<8x96xf32>
    %27 = tpu.matmul %25, %26, %cst_12 {dimension_numbers = #tpu.dot_dimension_numbers<[1], [0], [0], [1], [0, 0, 1, 1], [], []>} : vector<8x32xf32>, vector<32x96xf32>, vector<8x96xf32> -> vector<8x96xf32>
    %c0_13 = arith.constant 0 : index
    %c0_14 = arith.constant 0 : index
    %28 = vector.load %arg5[%c0_13, %c0_14] : memref<1x96xf32, #tpu.memory_space<vmem>>, vector<1x96xf32>
    %29 = vector.broadcast %28 : vector<1x96xf32> to vector<8x96xf32>
    %30 = arith.addf %27, %29 : vector<8x96xf32>
    %31 = vector.extract_strided_slice %30 {offsets = [0, 0], sizes = [8, 8], strides = [1, 1]} : vector<8x96xf32> to vector<8x8xf32>
    %32 = vector.extract_strided_slice %30 {offsets = [0, 32], sizes = [8, 8], strides = [1, 1]} : vector<8x96xf32> to vector<8x8xf32>
    %33 = vector.extract_strided_slice %30 {offsets = [0, 64], sizes = [8, 8], strides = [1, 1]} : vector<8x96xf32> to vector<8x8xf32>
    %cst_15 = arith.constant dense<0.000000e+00> : vector<8x8xf32>
    %34 = tpu.matmul %31, %32, %cst_15 {dimension_numbers = #tpu.dot_dimension_numbers<[1], [1], [0], [0], [0, 0, 1, 0], [], []>} : vector<8x8xf32>, vector<8x8xf32>, vector<8x8xf32> -> vector<8x8xf32>
    %cst_16 = arith.constant 0.353553385 : f32
    %35 = vector.broadcast %cst_16 : f32 to vector<8x8xf32>
    %36 = arith.mulf %34, %35 : vector<8x8xf32>
    %cst_17 = arith.constant dense<0xFF800000> : vector<8xf32>
    %37 = vector.multi_reduction <maximumf>, %36, %cst_17 [1] : vector<8x8xf32> to vector<8xf32>
    %38 = vector.shape_cast %37 : vector<8xf32> to vector<8x1xf32>
    %39 = vector.broadcast %38 : vector<8x1xf32> to vector<8x8xf32>
    %40 = arith.subf %36, %39 : vector<8x8xf32>
    %41 = math.exp %40 : vector<8x8xf32>
    %cst_18 = arith.constant dense<0.000000e+00> : vector<8xf32>
    %42 = vector.multi_reduction <add>, %41, %cst_18 [1] : vector<8x8xf32> to vector<8xf32>
    %43 = vector.shape_cast %42 : vector<8xf32> to vector<8x1xf32>
    %44 = tpu.reciprocal %43 {approx = true} : vector<8x1xf32> -> vector<8x1xf32>
    %45 = vector.broadcast %44 : vector<8x1xf32> to vector<8x8xf32>
    %46 = arith.mulf %41, %45 : vector<8x8xf32>
    %c0_19 = arith.constant 0 : index
    %c0_20 = arith.constant 0 : index
    %c0_21 = arith.constant 0 : index
    %c0_22 = arith.constant 0 : index
    %47 = vector.load %arg11[%c0_19, %c0_20, %c0_21, %c0_22] : memref<1x4x8x8xf32, #tpu.memory_space<vmem>>, vector<1x1x8x8xf32>
    %48 = vector.shape_cast %47 : vector<1x1x8x8xf32> to vector<8x8xf32>
    %49 = vector.shape_cast %46 : vector<8x8xf32> to vector<1x1x8x8xf32>
    tpu.vector_store %arg11[%c0_19, %c0_20, %c0_21, %c0_22], %49 {strides = array<i32>} : memref<1x4x8x8xf32, #tpu.memory_space<vmem>>, vector<1x1x8x8xf32>,
    %cst_23 = arith.constant dense<0.000000e+00> : vector<8x8xf32>
    %50 = tpu.matmul %46, %33, %cst_23 {dimension_numbers = #tpu.dot_dimension_numbers<[1], [0], [0], [1], [0, 0, 1, 1], [], []>} : vector<8x8xf32>, vector<8x8xf32>, vector<8x8xf32> -> vector<8x8xf32>
    %c0_24 = arith.constant 0 : index
    %c0_25 = arith.constant 0 : index
    %51 = vector.load %arg12[%c0_24, %c0_25] : memref<8x32xf32, #tpu.memory_space<vmem>>, vector<8x8xf32>
    tpu.vector_store %arg12[%c0_24, %c0_25], %50 {strides = array<i32>} : memref<8x32xf32, #tpu.memory_space<vmem>>, vector<8x8xf32>,
    %52 = vector.extract_strided_slice %30 {offsets = [0, 8], sizes = [8, 8], strides = [1, 1]} : vector<8x96xf32> to vector<8x8xf32>
    %53 = vector.extract_strided_slice %30 {offsets = [0, 40], sizes = [8, 8], strides = [1, 1]} : vector<8x96xf32> to vector<8x8xf32>
    %54 = vector.extract_strided_slice %30 {offsets = [0, 72], sizes = [8, 8], strides = [1, 1]} : vector<8x96xf32> to vector<8x8xf32>
    %cst_26 = arith.constant dense<0.000000e+00> : vector<8x8xf32>
    %55 = tpu.matmul %52, %53, %cst_26 {dimension_numbers = #tpu.dot_dimension_numbers<[1], [1], [0], [0], [0, 0, 1, 0], [], []>} : vector<8x8xf32>, vector<8x8xf32>, vector<8x8xf32> -> vector<8x8xf32>
    %cst_27 = arith.constant 0.353553385 : f32
    %56 = vector.broadcast %cst_27 : f32 to vector<8x8xf32>
    %57 = arith.mulf %55, %56 : vector<8x8xf32>
    %cst_28 = arith.constant dense<0xFF800000> : vector<8xf32>
    %58 = vector.multi_reduction <maximumf>, %57, %cst_28 [1] : vector<8x8xf32> to vector<8xf32>
    %59 = vector.shape_cast %58 : vector<8xf32> to vector<8x1xf32>
    %60 = vector.broadcast %59 : vector<8x1xf32> to vector<8x8xf32>
    %61 = arith.subf %57, %60 : vector<8x8xf32>
    %62 = math.exp %61 : vector<8x8xf32>
    %cst_29 = arith.constant dense<0.000000e+00> : vector<8xf32>
    %63 = vector.multi_reduction <add>, %62, %cst_29 [1] : vector<8x8xf32> to vector<8xf32>
    %64 = vector.shape_cast %63 : vector<8xf32> to vector<8x1xf32>
    %65 = tpu.reciprocal %64 {approx = true} : vector<8x1xf32> -> vector<8x1xf32>
    %66 = vector.broadcast %65 : vector<8x1xf32> to vector<8x8xf32>
    %67 = arith.mulf %62, %66 : vector<8x8xf32>
    %c0_30 = arith.constant 0 : index
    %c1 = arith.constant 1 : index
    %c0_31 = arith.constant 0 : index
    %c0_32 = arith.constant 0 : index
    %68 = vector.load %arg11[%c0_30, %c1, %c0_31, %c0_32] : memref<1x4x8x8xf32, #tpu.memory_space<vmem>>, vector<1x1x8x8xf32>
    %69 = vector.shape_cast %68 : vector<1x1x8x8xf32> to vector<8x8xf32>
    %70 = vector.shape_cast %67 : vector<8x8xf32> to vector<1x1x8x8xf32>
    tpu.vector_store %arg11[%c0_30, %c1, %c0_31, %c0_32], %70 {strides = array<i32>} : memref<1x4x8x8xf32, #tpu.memory_space<vmem>>, vector<1x1x8x8xf32>,
    %cst_33 = arith.constant dense<0.000000e+00> : vector<8x8xf32>
    %71 = tpu.matmul %67, %54, %cst_33 {dimension_numbers = #tpu.dot_dimension_numbers<[1], [0], [0], [1], [0, 0, 1, 1], [], []>} : vector<8x8xf32>, vector<8x8xf32>, vector<8x8xf32> -> vector<8x8xf32>
    %c0_34 = arith.constant 0 : index
    %c8 = arith.constant 8 : index
    %72 = vector.load %arg12[%c0_34, %c8] : memref<8x32xf32, #tpu.memory_space<vmem>>, vector<8x8xf32>
    tpu.vector_store %arg12[%c0_34, %c8], %71 {strides = array<i32>} : memref<8x32xf32, #tpu.memory_space<vmem>>, vector<8x8xf32>,
    %73 = vector.extract_strided_slice %30 {offsets = [0, 16], sizes = [8, 8], strides = [1, 1]} : vector<8x96xf32> to vector<8x8xf32>
    %74 = vector.extract_strided_slice %30 {offsets = [0, 48], sizes = [8, 8], strides = [1, 1]} : vector<8x96xf32> to vector<8x8xf32>
    %75 = vector.extract_strided_slice %30 {offsets = [0, 80], sizes = [8, 8], strides = [1, 1]} : vector<8x96xf32> to vector<8x8xf32>
    %cst_35 = arith.constant dense<0.000000e+00> : vector<8x8xf32>
    %76 = tpu.matmul %73, %74, %cst_35 {dimension_numbers = #tpu.dot_dimension_numbers<[1], [1], [0], [0], [0, 0, 1, 0], [], []>} : vector<8x8xf32>, vector<8x8xf32>, vector<8x8xf32> -> vector<8x8xf32>
    %cst_36 = arith.constant 0.353553385 : f32
    %77 = vector.broadcast %cst_36 : f32 to vector<8x8xf32>
    %78 = arith.mulf %76, %77 : vector<8x8xf32>
    %cst_37 = arith.constant dense<0xFF800000> : vector<8xf32>
    %79 = vector.multi_reduction <maximumf>, %78, %cst_37 [1] : vector<8x8xf32> to vector<8xf32>
    %80 = vector.shape_cast %79 : vector<8xf32> to vector<8x1xf32>
    %81 = vector.broadcast %80 : vector<8x1xf32> to vector<8x8xf32>
    %82 = arith.subf %78, %81 : vector<8x8xf32>
    %83 = math.exp %82 : vector<8x8xf32>
    %cst_38 = arith.constant dense<0.000000e+00> : vector<8xf32>
    %84 = vector.multi_reduction <add>, %83, %cst_38 [1] : vector<8x8xf32> to vector<8xf32>
    %85 = vector.shape_cast %84 : vector<8xf32> to vector<8x1xf32>
    %86 = tpu.reciprocal %85 {approx = true} : vector<8x1xf32> -> vector<8x1xf32>
    %87 = vector.broadcast %86 : vector<8x1xf32> to vector<8x8xf32>
    %88 = arith.mulf %83, %87 : vector<8x8xf32>
    %c0_39 = arith.constant 0 : index
    %c2 = arith.constant 2 : index
    %c0_40 = arith.constant 0 : index
    %c0_41 = arith.constant 0 : index
    %89 = vector.load %arg11[%c0_39, %c2, %c0_40, %c0_41] : memref<1x4x8x8xf32, #tpu.memory_space<vmem>>, vector<1x1x8x8xf32>
    %90 = vector.shape_cast %89 : vector<1x1x8x8xf32> to vector<8x8xf32>
    %91 = vector.shape_cast %88 : vector<8x8xf32> to vector<1x1x8x8xf32>
    tpu.vector_store %arg11[%c0_39, %c2, %c0_40, %c0_41], %91 {strides = array<i32>} : memref<1x4x8x8xf32, #tpu.memory_space<vmem>>, vector<1x1x8x8xf32>,
    %cst_42 = arith.constant dense<0.000000e+00> : vector<8x8xf32>
    %92 = tpu.matmul %88, %75, %cst_42 {dimension_numbers = #tpu.dot_dimension_numbers<[1], [0], [0], [1], [0, 0, 1, 1], [], []>} : vector<8x8xf32>, vector<8x8xf32>, vector<8x8xf32> -> vector<8x8xf32>
    %c0_43 = arith.constant 0 : index
    %c16 = arith.constant 16 : index
    %93 = vector.load %arg12[%c0_43, %c16] : memref<8x32xf32, #tpu.memory_space<vmem>>, vector<8x8xf32>
    tpu.vector_store %arg12[%c0_43, %c16], %92 {strides = array<i32>} : memref<8x32xf32, #tpu.memory_space<vmem>>, vector<8x8xf32>,
    %94 = vector.extract_strided_slice %30 {offsets = [0, 24], sizes = [8, 8], strides = [1, 1]} : vector<8x96xf32> to vector<8x8xf32>
    %95 = vector.extract_strided_slice %30 {offsets = [0, 56], sizes = [8, 8], strides = [1, 1]} : vector<8x96xf32> to vector<8x8xf32>
    %96 = vector.extract_strided_slice %30 {offsets = [0, 88], sizes = [8, 8], strides = [1, 1]} : vector<8x96xf32> to vector<8x8xf32>
    %cst_44 = arith.constant dense<0.000000e+00> : vector<8x8xf32>
    %97 = tpu.matmul %94, %95, %cst_44 {dimension_numbers = #tpu.dot_dimension_numbers<[1], [1], [0], [0], [0, 0, 1, 0], [], []>} : vector<8x8xf32>, vector<8x8xf32>, vector<8x8xf32> -> vector<8x8xf32>
    %cst_45 = arith.constant 0.353553385 : f32
    %98 = vector.broadcast %cst_45 : f32 to vector<8x8xf32>
    %99 = arith.mulf %97, %98 : vector<8x8xf32>
    %cst_46 = arith.constant dense<0xFF800000> : vector<8xf32>
    %100 = vector.multi_reduction <maximumf>, %99, %cst_46 [1] : vector<8x8xf32> to vector<8xf32>
    %101 = vector.shape_cast %100 : vector<8xf32> to vector<8x1xf32>
    %102 = vector.broadcast %101 : vector<8x1xf32> to vector<8x8xf32>
    %103 = arith.subf %99, %102 : vector<8x8xf32>
    %104 = math.exp %103 : vector<8x8xf32>
    %cst_47 = arith.constant dense<0.000000e+00> : vector<8xf32>
    %105 = vector.multi_reduction <add>, %104, %cst_47 [1] : vector<8x8xf32> to vector<8xf32>
    %106 = vector.shape_cast %105 : vector<8xf32> to vector<8x1xf32>
    %107 = tpu.reciprocal %106 {approx = true} : vector<8x1xf32> -> vector<8x1xf32>
    %108 = vector.broadcast %107 : vector<8x1xf32> to vector<8x8xf32>
    %109 = arith.mulf %104, %108 : vector<8x8xf32>
    %c0_48 = arith.constant 0 : index
    %c3 = arith.constant 3 : index
    %c0_49 = arith.constant 0 : index
    %c0_50 = arith.constant 0 : index
    %110 = vector.load %arg11[%c0_48, %c3, %c0_49, %c0_50] : memref<1x4x8x8xf32, #tpu.memory_space<vmem>>, vector<1x1x8x8xf32>
    %111 = vector.shape_cast %110 : vector<1x1x8x8xf32> to vector<8x8xf32>
    %112 = vector.shape_cast %109 : vector<8x8xf32> to vector<1x1x8x8xf32>
    tpu.vector_store %arg11[%c0_48, %c3, %c0_49, %c0_50], %112 {strides = array<i32>} : memref<1x4x8x8xf32, #tpu.memory_space<vmem>>, vector<1x1x8x8xf32>,
    %cst_51 = arith.constant dense<0.000000e+00> : vector<8x8xf32>
    %113 = tpu.matmul %109, %96, %cst_51 {dimension_numbers = #tpu.dot_dimension_numbers<[1], [0], [0], [1], [0, 0, 1, 1], [], []>} : vector<8x8xf32>, vector<8x8xf32>, vector<8x8xf32> -> vector<8x8xf32>
    %c0_52 = arith.constant 0 : index
    %c24 = arith.constant 24 : index
    %114 = vector.load %arg12[%c0_52, %c24] : memref<8x32xf32, #tpu.memory_space<vmem>>, vector<8x8xf32>
    tpu.vector_store %arg12[%c0_52, %c24], %113 {strides = array<i32>} : memref<8x32xf32, #tpu.memory_space<vmem>>, vector<8x8xf32>,
    %c0_53 = arith.constant 0 : index
    %c0_54 = arith.constant 0 : index
    %115 = vector.load %arg12[%c0_53, %c0_54] : memref<8x32xf32, #tpu.memory_space<vmem>>, vector<8x32xf32>
    %116 = arith.addf %1, %115 : vector<8x32xf32>
    %cst_55 = arith.constant dense<0.000000e+00> : vector<8xf32>
    %117 = vector.multi_reduction <add>, %116, %cst_55 [1] : vector<8x32xf32> to vector<8xf32>
    %118 = vector.shape_cast %117 : vector<8xf32> to vector<8x1xf32>
    %cst_56 = arith.constant 3.200000e+01 : f32
    %119 = vector.broadcast %cst_56 : f32 to vector<8x1xf32>
    %120 = arith.divf %118, %119 : vector<8x1xf32>
    %121 = vector.broadcast %120 : vector<8x1xf32> to vector<8x32xf32>
    %122 = arith.subf %116, %121 : vector<8x32xf32>
    %123 = arith.mulf %122, %122 : vector<8x32xf32>
    %cst_57 = arith.constant dense<0.000000e+00> : vector<8xf32>
    %124 = vector.multi_reduction <add>, %123, %cst_57 [1] : vector<8x32xf32> to vector<8xf32>
    %125 = vector.shape_cast %124 : vector<8xf32> to vector<8x1xf32>
    %cst_58 = arith.constant 3.200000e+01 : f32
    %126 = vector.broadcast %cst_58 : f32 to vector<8x1xf32>
    %127 = arith.divf %125, %126 : vector<8x1xf32>
    %128 = vector.broadcast %120 : vector<8x1xf32> to vector<8x32xf32>
    %129 = arith.subf %116, %128 : vector<8x32xf32>
    %cst_59 = arith.constant 9.99999974E-6 : f32
    %130 = vector.broadcast %cst_59 : f32 to vector<8x1xf32>
    %131 = arith.addf %127, %130 : vector<8x1xf32>
    %132 = math.rsqrt %131 : vector<8x1xf32>
    %133 = vector.broadcast %132 : vector<8x1xf32> to vector<8x32xf32>
    %134 = arith.mulf %129, %133 : vector<8x32xf32>
    %135 = vector.broadcast %2 : vector<1x32xf32> to vector<8x32xf32>
    %136 = arith.mulf %134, %135 : vector<8x32xf32>
    %137 = vector.broadcast %3 : vector<1x32xf32> to vector<8x32xf32>
    %138 = arith.addf %136, %137 : vector<8x32xf32>
    %c0_60 = arith.constant 0 : index
    %c0_61 = arith.constant 0 : index
    %139 = vector.load %arg6[%c0_60, %c0_61] : memref<32x128xf32, #tpu.memory_space<vmem>>, vector<32x128xf32>
    %cst_62 = arith.constant dense<0.000000e+00> : vector<8x128xf32>
    %140 = tpu.matmul %138, %139, %cst_62 {dimension_numbers = #tpu.dot_dimension_numbers<[1], [0], [0], [1], [0, 0, 1, 1], [], []>} : vector<8x32xf32>, vector<32x128xf32>, vector<8x128xf32> -> vector<8x128xf32>
    %c0_63 = arith.constant 0 : index
    %c0_64 = arith.constant 0 : index
    %141 = vector.load %arg7[%c0_63, %c0_64] : memref<1x128xf32, #tpu.memory_space<vmem>>, vector<1x128xf32>
    %142 = vector.broadcast %141 : vector<1x128xf32> to vector<8x128xf32>
    %143 = arith.addf %140, %142 : vector<8x128xf32>
    %cst_65 = arith.constant 5.000000e-01 : f32
    %144 = vector.broadcast %cst_65 : f32 to vector<8x128xf32>
    %145 = arith.mulf %144, %143 : vector<8x128xf32>
    %cst_66 = arith.constant 4.471500e-02 : f32
    %146 = vector.broadcast %cst_66 : f32 to vector<8x128xf32>
    %147 = arith.mulf %146, %143 : vector<8x128xf32>
    %148 = arith.mulf %147, %143 : vector<8x128xf32>
    %149 = arith.mulf %148, %143 : vector<8x128xf32>
    %150 = arith.addf %143, %149 : vector<8x128xf32>
    %cst_67 = arith.constant 0.797884583 : f32
    %151 = vector.broadcast %cst_67 : f32 to vector<8x128xf32>
    %152 = arith.mulf %151, %150 : vector<8x128xf32>
    %153 = math.tanh %152 : vector<8x128xf32>
    %cst_68 = arith.constant 1.000000e+00 : f32
    %154 = vector.broadcast %cst_68 : f32 to vector<8x128xf32>
    %155 = arith.addf %154, %153 : vector<8x128xf32>
    %156 = arith.mulf %145, %155 : vector<8x128xf32>
    %c0_69 = arith.constant 0 : index
    %c0_70 = arith.constant 0 : index
    %157 = vector.load %arg8[%c0_69, %c0_70] : memref<128x32xf32, #tpu.memory_space<vmem>>, vector<128x32xf32>
    %cst_71 = arith.constant dense<0.000000e+00> : vector<8x32xf32>
    %158 = tpu.matmul %156, %157, %cst_71 {dimension_numbers = #tpu.dot_dimension_numbers<[1], [0], [0], [1], [0, 0, 1, 1], [], []>} : vector<8x128xf32>, vector<128x32xf32>, vector<8x32xf32> -> vector<8x32xf32>
    %c0_72 = arith.constant 0 : index
    %c0_73 = arith.constant 0 : index
    %159 = vector.load %arg9[%c0_72, %c0_73] : memref<1x32xf32, #tpu.memory_space<vmem>>, vector<1x32xf32>
    %160 = vector.broadcast %159 : vector<1x32xf32> to vector<8x32xf32>
    %161 = arith.addf %158, %160 : vector<8x32xf32>
    %162 = arith.addf %116, %161 : vector<8x32xf32>
    %c0_74 = arith.constant 0 : index
    %c0_75 = arith.constant 0 : index
    %c0_76 = arith.constant 0 : index
    %163 = vector.load %arg10[%c0_74, %c0_75, %c0_76] : memref<1x8x32xf32, #tpu.memory_space<vmem>>, vector<1x8x32xf32>
    %164 = vector.shape_cast %163 : vector<1x8x32xf32> to vector<8x32xf32>
    %165 = vector.shape_cast %162 : vector<8x32xf32> to vector<1x8x32xf32>
    tpu.vector_store %arg10[%c0_74, %c0_75, %c0_76], %165 {strides = array<i32>} : memref<1x8x32xf32, #tpu.memory_space<vmem>>, vector<1x8x32xf32>,
    return
  }
  func.func @transform_0(%arg0: i32) -> (i32, i32, i32) {
    %c0_i32 = arith.constant 0 : i32
    %c0_i32_0 = arith.constant 0 : i32
    %c0_i32_1 = arith.constant 0 : i32
    return %arg0, %c0_i32, %c0_i32_0 : i32, i32, i32
  }
  func.func @transform_1(%arg0: i32) -> (i32, i32) {
    %c0_i32 = arith.constant 0 : i32
    %c0_i32_0 = arith.constant 0 : i32
    %c0_i32_1 = arith.constant 0 : i32
    return %c0_i32, %c0_i32_0 : i32, i32
  }
  func.func @transform_2(%arg0: i32) -> (i32, i32) {
    %c0_i32 = arith.constant 0 : i32
    %c0_i32_0 = arith.constant 0 : i32
    %c0_i32_1 = arith.constant 0 : i32
    return %c0_i32, %c0_i32_0 : i32, i32
  }
  func.func @transform_3(%arg0: i32) -> (i32, i32) {
    %c0_i32 = arith.constant 0 : i32
    %c0_i32_0 = arith.constant 0 : i32
    %c0_i32_1 = arith.constant 0 : i32
    return %c0_i32, %c0_i32_0 : i32, i32
  }
  func.func @transform_4(%arg0: i32) -> (i32, i32) {
    %c0_i32 = arith.constant 0 : i32
    %c0_i32_0 = arith.constant 0 : i32
    %c0_i32_1 = arith.constant 0 : i32
    return %c0_i32, %c0_i32_0 : i32, i32
  }
  func.func @transform_5(%arg0: i32) -> (i32, i32) {
    %c0_i32 = arith.constant 0 : i32
    %c0_i32_0 = arith.constant 0 : i32
    %c0_i32_1 = arith.constant 0 : i32
    return %c0_i32, %c0_i32_0 : i32, i32
  }
  func.func @transform_6(%arg0: i32) -> (i32, i32) {
    %c0_i32 = arith.constant 0 : i32
    %c0_i32_0 = arith.constant 0 : i32
    %c0_i32_1 = arith.constant 0 : i32
    return %c0_i32, %c0_i32_0 : i32, i32
  }
  func.func @transform_7(%arg0: i32) -> (i32, i32) {
    %c0_i32 = arith.constant 0 : i32
    %c0_i32_0 = arith.constant 0 : i32
    %c0_i32_1 = arith.constant 0 : i32
    return %c0_i32, %c0_i32_0 : i32, i32
  }
  func.func @transform_8(%arg0: i32) -> (i32, i32) {
    %c0_i32 = arith.constant 0 : i32
    %c0_i32_0 = arith.constant 0 : i32
    %c0_i32_1 = arith.constant 0 : i32
    return %c0_i32, %c0_i32_0 : i32, i32
  }
  func.func @transform_9(%arg0: i32) -> (i32, i32, i32) {
    %c0_i32 = arith.constant 0 : i32
    %c0_i32_0 = arith.constant 0 : i32
    %c0_i32_1 = arith.constant 0 : i32
    return %arg0, %c0_i32, %c0_i32_0 : i32, i32, i32
  }
  func.func @transform_10(%arg0: i32) -> (i32, i32, i32, i32) {
    %c0_i32 = arith.constant 0 : i32
    %c0_i32_0 = arith.constant 0 : i32
    %c0_i32_1 = arith.constant 0 : i32
    %c0_i32_2 = arith.constant 0 : i32
    return %arg0, %c0_i32, %c0_i32_0, %c0_i32_1 : i32, i32, i32, i32
  }
}

</mosaic_0001>

<llo_original>
// kernel: tpu_custom_call.1
$region0: #{tpu_custom_call.1}
  #allocation0 [shape = 'u32[]', space=smem, size = 0x4, offset = 0x4, fixed_abs, tag = 'smem constant byte address 0x4 - core index']
  #allocation1 [shape = 'u32[72,128]{1,0:T(1,128)}', space=vmem, size = 0x9000, scoped, tag = 'internal scratch']
  #allocation2 [shape = 'f32[8,32]{1,0:T(8,128)}', space=vmem, size = 0x1000, scoped, tag = 'scratch operand']
  %s0 = inlined_call_operand.vmem [shape: f32[2,8,32], index: 0, kind: input, shape index: {}]
  %s1 = inlined_call_operand.vmem [shape: f32[1,32], index: 1, kind: input, shape index: {}]
  %s2 = inlined_call_operand.vmem [shape: f32[1,32], index: 2, kind: input, shape index: {}]
  %s3 = inlined_call_operand.vmem [shape: f32[32,96], index: 3, kind: input, shape index: {}]
  %s4 = inlined_call_operand.vmem [shape: f32[1,96], index: 4, kind: input, shape index: {}]
  %s5 = inlined_call_operand.vmem [shape: f32[32,128], index: 5, kind: input, shape index: {}]
  %s6 = inlined_call_operand.vmem [shape: f32[1,128], index: 6, kind: input, shape index: {}]
  %s7 = inlined_call_operand.vmem [shape: f32[128,32], index: 7, kind: input, shape index: {}]
  %s8 = inlined_call_operand.vmem [shape: f32[1,32], index: 8, kind: input, shape index: {}]
  %s9 = inlined_call_operand.hbm [shape: f32[2,8,32], index: 9, kind: output, shape index: {0}]
  %s10 = inlined_call_operand.hbm [shape: f32[2,4,8,8], index: 10, kind: output, shape index: {1}]
  %11 = xla_tuple %s9, %s10
  %s12 = sld [smem:[#allocation0]]
  $region77: #{tpu_custom_call.1} parent=0
    _
  %s14 = ssub.s32 1, %s12
  %s15 = scalar_select 0, %s14, %s12
  $region1: #{tpu_custom_call.1} parent=0
    #allocation3 [shape = 'u8[8192]{0}', space=vmem, size = 0x2000, scoped, tag = 'output window, operand 0']
    #allocation4 [shape = 's32[2]{0}', space=sflag, size = 0x8, scoped, tag = 'scoped memory for tpu_custom_call.1']
    #allocation5 [shape = 'u8[32768]{0}', space=vmem, size = 0x8000, scoped, tag = 'output window, operand 1']
    #allocation6 [shape = 's32[2]{0}', space=sflag, size = 0x8, scoped, tag = 'scoped memory for tpu_custom_call.1']
    %16 = vsyncpa [#allocation4], 0
    %s17 = scalar_lea.sflag [#allocation4], 1
    %18 = vsyncpa %s17, 0
    %19 = vsyncpa [#allocation6], 0
    %s20 = scalar_lea.sflag [#allocation6], 1
    %21 = vsyncpa %s20, 0
    loop: start=0, step=1, limit=4
    $region2: #{tpu_custom_call.1} parent=1 // loop_pre_header
      _
    $region3: #{tpu_custom_call.1} parent=1 // loop_header
      %s23 = sphi 0, %s27
      %p24 = scmp.ge.s32.totalorder %s23, 4
      %s33 = sphi 0, %s35
      %s36 = sphi 0, %s33
      %s37 = sphi 0, %s36
      %s53 = sphi 0, %s37
      %s57 = sphi 0, %s57
      %s59 = sphi 0, %s57
      %s60 = sphi 0, %s59
      %s74 = sphi 0, %s60
      %s78 = sphi 0, %s78
      %s80 = sphi 0, %s78
      %s81 = sphi 0, %s80
      %s95 = sphi 0, %s81
      %s99 = sphi 0, %s99
      %s101 = sphi 0, %s99
      %s102 = sphi 0, %s101
      %s116 = sphi 0, %s102
      %s120 = sphi 0, %s120
      %s122 = sphi 0, %s120
      %s123 = sphi 0, %s122
      %s137 = sphi 0, %s123
      %s141 = sphi 0, %s141
      %s143 = sphi 0, %s141
      %s144 = sphi 0, %s143
      %s158 = sphi 0, %s144
      %s162 = sphi 0, %s162
      %s164 = sphi 0, %s162
      %s165 = sphi 0, %s164
      %s179 = sphi 0, %s165
      %s183 = sphi 0, %s183
      %s185 = sphi 0, %s183
      %s186 = sphi 0, %s185
      %s200 = sphi 0, %s186
      %s204 = sphi 0, %s204
      %s206 = sphi 0, %s204
      %s207 = sphi 0, %s206
      %s221 = sphi 0, %s207
      %s227 = sphi 0, %s229
      %s230 = sphi 0, %s227
      %s231 = sphi 0, %s230
      %s247 = sphi 0, %s231
      %s253 = sphi 0, %s255
      %s256 = sphi 0, %s253
      %s257 = sphi 0, %s256
      %s273 = sphi 0, %s257
    $region4: #{tpu_custom_call.1} parent=1 // loop_header_branch
      %26 = sbr.rel (%p24) target = $region8
    $region5: #{tpu_custom_call.1} parent=1 // loop_body
      %s28 = ssub.s32 %s23, 1
      %s29 = ssub.s32 %s23, 2
      %s30 = sadd.s32 %s23, 1
      %s31 = ssub.s32 %s23, %s30
      %p32 = scmp.eq.s32.totalorder %s31, 0
      %s34 = sadd.s32 %s33, 1
      %s35 = scalar_select %p32, %s33, %s34
      %p38 = pneg %p32
      %p39 = scmp.eq.s32.totalorder %s23, 1
      %p40 = por %p38, %p39
      %p41 = scmp.ne.s32.totalorder %s33, %s36
      %p42 = scmp.eq.s32.totalorder %s23, 0
      %p43 = por %p41, %p42
      %p44 = scmp.ne.s32.totalorder %s33, %s36
      %p45 = scmp.eq.s32.totalorder %s28, 1
      %p46 = por %p44, %p45
      %p47 = scmp.ne.s32.totalorder %s36, %s37
      %p48 = scmp.eq.s32.totalorder %s28, 0
      %p49 = por %p47, %p48
      %p50 = scmp.ne.s32.totalorder %s36, %s37
      %p51 = scmp.eq.s32.totalorder %s29, 1
      %p52 = por %p50, %p51
      %p54 = scmp.ne.s32.totalorder %s37, %s53
      %p55 = scmp.eq.s32.totalorder %s29, 0
      %p56 = por %p54, %p55
      %s58 = sadd.s32 %s57, 1
      %p61 = scmp.eq.s32.totalorder %s23, 1
      %p62 = scmp.ne.s32.totalorder %s57, %s59
      %p63 = scmp.eq.s32.totalorder %s23, 0
      %p64 = por %p62, %p63
      %p65 = scmp.ne.s32.totalorder %s57, %s59
      %p66 = scmp.eq.s32.totalorder %s28, 1
      %p67 = por %p65, %p66
      %p68 = scmp.ne.s32.totalorder %s59, %s60
      %p69 = scmp.eq.s32.totalorder %s28, 0
      %p70 = por %p68, %p69
      %p71 = scmp.ne.s32.totalorder %s59, %s60
      %p72 = scmp.eq.s32.totalorder %s29, 1
      %p73 = por %p71, %p72
      %p75 = scmp.ne.s32.totalorder %s60, %s74
      %p76 = scmp.eq.s32.totalorder %s29, 0
      %p77 = por %p75, %p76
      %s79 = sadd.s32 %s78, 1
      %p82 = scmp.eq.s32.totalorder %s23, 1
      %p83 = scmp.ne.s32.totalorder %s78, %s80
      %p84 = scmp.eq.s32.totalorder %s23, 0
      %p85 = por %p83, %p84
      %p86 = scmp.ne.s32.totalorder %s78, %s80
      %p87 = scmp.eq.s32.totalorder %s28, 1
      %p88 = por %p86, %p87
      %p89 = scmp.ne.s32.totalorder %s80, %s81
      %p90 = scmp.eq.s32.totalorder %s28, 0
      %p91 = por %p89, %p90
      %p92 = scmp.ne.s32.totalorder %s80, %s81
      %p93 = scmp.eq.s32.totalorder %s29, 1
      %p94 = por %p92, %p93
      %p96 = scmp.ne.s32.totalorder %s81, %s95
      %p97 = scmp.eq.s32.totalorder %s29, 0
      %p98 = por %p96, %p97
      %s100 = sadd.s32 %s99, 1
      %p103 = scmp.eq.s32.totalorder %s23, 1
      %p104 = scmp.ne.s32.totalorder %s99, %s101
      %p105 = scmp.eq.s32.totalorder %s23, 0
      %p106 = por %p104, %p105
      %p107 = scmp.ne.s32.totalorder %s99, %s101
      %p108 = scmp.eq.s32.totalorder %s28, 1
      %p109 = por %p107, %p108
      %p110 = scmp.ne.s32.totalorder %s101, %s102
      %p111 = scmp.eq.s32.totalorder %s28, 0
      %p112 = por %p110, %p111
      %p113 = scmp.ne.s32.totalorder %s101, %s102
      %p114 = scmp.eq.s32.totalorder %s29, 1
      %p115 = por %p113, %p114
      %p117 = scmp.ne.s32.totalorder %s102, %s116
      %p118 = scmp.eq.s32.totalorder %s29, 0
      %p119 = por %p117, %p118
      %s121 = sadd.s32 %s120, 1
      %p124 = scmp.eq.s32.totalorder %s23, 1
      %p125 = scmp.ne.s32.totalorder %s120, %s122
      %p126 = scmp.eq.s32.totalorder %s23, 0
      %p127 = por %p125, %p126
      %p128 = scmp.ne.s32.totalorder %s120, %s122
      %p129 = scmp.eq.s32.totalorder %s28, 1
      %p130 = por %p128, %p129
      %p131 = scmp.ne.s32.totalorder %s122, %s123
      %p132 = scmp.eq.s32.totalorder %s28, 0
      %p133 = por %p131, %p132
      %p134 = scmp.ne.s32.totalorder %s122, %s123
      %p135 = scmp.eq.s32.totalorder %s29, 1
      %p136 = por %p134, %p135
      %p138 = scmp.ne.s32.totalorder %s123, %s137
      %p139 = scmp.eq.s32.totalorder %s29, 0
      %p140 = por %p138, %p139
      %s142 = sadd.s32 %s141, 1
      %p145 = scmp.eq.s32.totalorder %s23, 1
      %p146 = scmp.ne.s32.totalorder %s141, %s143
      %p147 = scmp.eq.s32.totalorder %s23, 0
      %p148 = por %p146, %p147
      %p149 = scmp.ne.s32.totalorder %s141, %s143
      %p150 = scmp.eq.s32.totalorder %s28, 1
      %p151 = por %p149, %p150
      %p152 = scmp.ne.s32.totalorder %s143, %s144
      %p153 = scmp.eq.s32.totalorder %s28, 0
      %p154 = por %p152, %p153
      %p155 = scmp.ne.s32.totalorder %s143, %s144
      %p156 = scmp.eq.s32.totalorder %s29, 1
      %p157 = por %p155, %p156
      %p159 = scmp.ne.s32.totalorder %s144, %s158
      %p160 = scmp.eq.s32.totalorder %s29, 0
      %p161 = por %p159, %p160
      %s163 = sadd.s32 %s162, 1
      %p166 = scmp.eq.s32.totalorder %s23, 1
      %p167 = scmp.ne.s32.totalorder %s162, %s164
      %p168 = scmp.eq.s32.totalorder %s23, 0
      %p169 = por %p167, %p168
      %p170 = scmp.ne.s32.totalorder %s162, %s164
      %p171 = scmp.eq.s32.totalorder %s28, 1
      %p172 = por %p170, %p171
      %p173 = scmp.ne.s32.totalorder %s164, %s165
      %p174 = scmp.eq.s32.totalorder %s28, 0
      %p175 = por %p173, %p174
      %p176 = scmp.ne.s32.totalorder %s164, %s165
      %p177 = scmp.eq.s32.totalorder %s29, 1
      %p178 = por %p176, %p177
      %p180 = scmp.ne.s32.totalorder %s165, %s179
      %p181 = scmp.eq.s32.totalorder %s29, 0
      %p182 = por %p180, %p181
      %s184 = sadd.s32 %s183, 1
      %p187 = scmp.eq.s32.totalorder %s23, 1
      %p188 = scmp.ne.s32.totalorder %s183, %s185
      %p189 = scmp.eq.s32.totalorder %s23, 0
      %p190 = por %p188, %p189
      %p191 = scmp.ne.s32.totalorder %s183, %s185
      %p192 = scmp.eq.s32.totalorder %s28, 1
      %p193 = por %p191, %p192
      %p194 = scmp.ne.s32.totalorder %s185, %s186
      %p195 = scmp.eq.s32.totalorder %s28, 0
      %p196 = por %p194, %p195
      %p197 = scmp.ne.s32.totalorder %s185, %s186
      %p198 = scmp.eq.s32.totalorder %s29, 1
      %p199 = por %p197, %p198
      %p201 = scmp.ne.s32.totalorder %s186, %s200
      %p202 = scmp.eq.s32.totalorder %s29, 0
      %p203 = por %p201, %p202
      %s205 = sadd.s32 %s204, 1
      %p208 = scmp.eq.s32.totalorder %s23, 1
      %p209 = scmp.ne.s32.totalorder %s204, %s206
      %p210 = scmp.eq.s32.totalorder %s23, 0
      %p211 = por %p209, %p210
      %p212 = scmp.ne.s32.totalorder %s204, %s206
      %p213 = scmp.eq.s32.totalorder %s28, 1
      %p214 = por %p212, %p213
      %p215 = scmp.ne.s32.totalorder %s206, %s207
      %p216 = scmp.eq.s32.totalorder %s28, 0
      %p217 = por %p215, %p216
      %p218 = scmp.ne.s32.totalorder %s206, %s207
      %p219 = scmp.eq.s32.totalorder %s29, 1
      %p220 = por %p218, %p219
      %p222 = scmp.ne.s32.totalorder %s207, %s221
      %p223 = scmp.eq.s32.totalorder %s29, 0
      %p224 = por %p222, %p223
      %s225 = ssub.s32 %s23, %s30
      %p226 = scmp.eq.s32.totalorder %s225, 0
      %s228 = sadd.s32 %s227, 1
      %s229 = scalar_select %p226, %s227, %s228
      %p232 = pneg %p226
      %p233 = scmp.eq.s32.totalorder %s23, 1
      %p234 = por %p232, %p233
      %p235 = scmp.ne.s32.totalorder %s227, %s230
      %p236 = scmp.eq.s32.totalorder %s23, 0
      %p237 = por %p235, %p236
      %p238 = scmp.ne.s32.totalorder %s227, %s230
      %p239 = scmp.eq.s32.totalorder %s28, 1
      %p240 = por %p238, %p239
      %p241 = scmp.ne.s32.totalorder %s230, %s231
      %p242 = scmp.eq.s32.totalorder %s28, 0
      %p243 = por %p241, %p242
      %p244 = scmp.ne.s32.totalorder %s230, %s231
      %p245 = scmp.eq.s32.totalorder %s29, 1
      %p246 = por %p244, %p245
      %p248 = scmp.ne.s32.totalorder %s231, %s247
      %p249 = scmp.eq.s32.totalorder %s29, 0
      %p250 = por %p248, %p249
      %s251 = ssub.s32 %s23, %s30
      %p252 = scmp.eq.s32.totalorder %s251, 0
      %s254 = sadd.s32 %s253, 1
      %s255 = scalar_select %p252, %s253, %s254
      %p258 = pneg %p252
      %p259 = scmp.eq.s32.totalorder %s23, 1
      %p260 = por %p258, %p259
      %p261 = scmp.ne.s32.totalorder %s253, %s256
      %p262 = scmp.eq.s32.totalorder %s23, 0
      %p263 = por %p261, %p262
      %p264 = scmp.ne.s32.totalorder %s253, %s256
      %p265 = scmp.eq.s32.totalorder %s28, 1
      %p266 = por %p264, %p265
      %p267 = scmp.ne.s32.totalorder %s256, %s257
      %p268 = scmp.eq.s32.totalorder %s28, 0
      %p269 = por %p267, %p268
      %p270 = scmp.ne.s32.totalorder %s256, %s257
      %p271 = scmp.eq.s32.totalorder %s29, 1
      %p272 = por %p270, %p271
      %p274 = scmp.ne.s32.totalorder %s257, %s273
      %p275 = scmp.eq.s32.totalorder %s29, 0
      %p276 = por %p274, %p275
      %p277 = scmp.le.s32.totalorder 1, %s23
      %p278 = scmp.lt.s32.totalorder %s23, 3
      %p279 = pnand %p277, %p278
      %p280 = pneg %p279
      // Predicated region
      $region9: #{tpu_custom_call.1} parent=5 // pred_check
        _
      $region10: #{tpu_custom_call.1} parent=5 // pred_check_branch
        %282 = sbr.rel (%p279) target = $region12
      $region11: #{tpu_custom_call.1} parent=5 // pred_region
        %s283 = ssub.s32 %s23, 1
        // Predicated region
        $region13: #{tpu_custom_call.1} parent=11 // pred_check
          %p284 = pneg %p70
        $region14: #{tpu_custom_call.1} parent=11 // pred_check_branch
          %286 = sbr.rel (%p284) target = $region16
        $region15: #{tpu_custom_call.1} parent=11 // pred_region
          _
        $region16: #{tpu_custom_call.1} parent=11 // pred_fallthru
          _
        // Predicated region
        $region17: #{tpu_custom_call.1} parent=11 // pred_check
          %p287 = pneg %p91
        $region18: #{tpu_custom_call.1} parent=11 // pred_check_branch
          %289 = sbr.rel (%p287) target = $region20
        $region19: #{tpu_custom_call.1} parent=11 // pred_region
          _
        $region20: #{tpu_custom_call.1} parent=11 // pred_fallthru
          _
        // Predicated region
        $region21: #{tpu_custom_call.1} parent=11 // pred_check
          %p290 = pneg %p112
        $region22: #{tpu_custom_call.1} parent=11 // pred_check_branch
          %292 = sbr.rel (%p290) target = $region24
        $region23: #{tpu_custom_call.1} parent=11 // pred_region
          _
        $region24: #{tpu_custom_call.1} parent=11 // pred_fallthru
          _
        // Predicated region
        $region25: #{tpu_custom_call.1} parent=11 // pred_check
          %p293 = pneg %p133
        $region26: #{tpu_custom_call.1} parent=11 // pred_check_branch
          %295 = sbr.rel (%p293) target = $region28
        $region27: #{tpu_custom_call.1} parent=11 // pred_region
          _
        $region28: #{tpu_custom_call.1} parent=11 // pred_fallthru
          _
        // Predicated region
        $region29: #{tpu_custom_call.1} parent=11 // pred_check
          %p296 = pneg %p154
        $region30: #{tpu_custom_call.1} parent=11 // pred_check_branch
          %298 = sbr.rel (%p296) target = $region32
        $region31: #{tpu_custom_call.1} parent=11 // pred_region
          _
        $region32: #{tpu_custom_call.1} parent=11 // pred_fallthru
          _
        // Predicated region
        $region33: #{tpu_custom_call.1} parent=11 // pred_check
          %p299 = pneg %p175
        $region34: #{tpu_custom_call.1} parent=11 // pred_check_branch
          %301 = sbr.rel (%p299) target = $region36
        $region35: #{tpu_custom_call.1} parent=11 // pred_region
          _
        $region36: #{tpu_custom_call.1} parent=11 // pred_fallthru
          _
        // Predicated region
        $region37: #{tpu_custom_call.1} parent=11 // pred_check
          %p302 = pneg %p196
        $region38: #{tpu_custom_call.1} parent=11 // pred_check_branch
          %304 = sbr.rel (%p302) target = $region40
        $region39: #{tpu_custom_call.1} parent=11 // pred_region
          _
        $region40: #{tpu_custom_call.1} parent=11 // pred_fallthru
          _
        // Predicated region
        $region41: #{tpu_custom_call.1} parent=11 // pred_check
          %p305 = pneg %p217
        $region42: #{tpu_custom_call.1} parent=11 // pred_check_branch
          %307 = sbr.rel (%p305) target = $region44
        $region43: #{tpu_custom_call.1} parent=11 // pred_region
          _
        $region44: #{tpu_custom_call.1} parent=11 // pred_fallthru
          _
      $region12: #{tpu_custom_call.1} parent=5 // pred_fallthru
        _
      %p308 = scmp.lt.s32.totalorder %s23, 2
      // Predicated region
      $region45: #{tpu_custom_call.1} parent=5 // pred_check
        %p309 = pneg %p308
      $region46: #{tpu_custom_call.1} parent=5 // pred_check_branch
        %311 = sbr.rel (%p309) target = $region48
      $region47: #{tpu_custom_call.1} parent=5 // pred_region
        // Predicated region
        $region49: #{tpu_custom_call.1} parent=47 // pred_check
          %p312 = pneg %p43
        $region50: #{tpu_custom_call.1} parent=47 // pred_check_branch
          %314 = sbr.rel (%p312) target = $region52
        $region51: #{tpu_custom_call.1} parent=47 // pred_region
          %p315 = scmp.lt.s32.totalorder %s23, 1
          %s316 = scalar_select %p315, %s23, 1
          %s317 = smul.addr %s316, 8
          %s318 = scalar_lea.vmem %s0, %s317
        $region52: #{tpu_custom_call.1} parent=47 // pred_fallthru
          _
      $region48: #{tpu_custom_call.1} parent=5 // pred_fallthru
        _
      %p319 = scmp.le.s32.totalorder 1, %s23
      %p320 = scmp.lt.s32.totalorder %s23, 3
      %p321 = pnand %p319, %p320
      %p322 = pneg %p321
      // Predicated region
      $region53: #{tpu_custom_call.1} parent=5 // pred_check
        _
      $region54: #{tpu_custom_call.1} parent=5 // pred_check_branch
        %324 = sbr.rel (%p321) target = $region56
      $region55: #{tpu_custom_call.1} parent=5 // pred_region
        %s325 = ssub.s32 %s23, 1
        %p326 = scmp.lt.s32.totalorder %s28, 1
        %s327 = scalar_select %p326, %s28, 1
        %s328 = smul.addr %s327, 8
        %s329 = scalar_lea.vmem %s0, %s328
        %p330 = pneg %p49
        %p331 = pneg %p46
        %p332 = pneg %p70
        %p333 = pneg %p67
        %p334 = pneg %p91
        %p335 = pneg %p88
        %p336 = pneg %p112
        %p337 = pneg %p109
        %p338 = pneg %p133
        %p339 = pneg %p130
        %p340 = pneg %p154
        %p341 = pneg %p151
        %p342 = pneg %p175
        %p343 = pneg %p172
        %p344 = pneg %p196
        %p345 = pneg %p193
        %p346 = pneg %p217
        %p347 = pneg %p214
        %p348 = pneg %p243
        %p349 = pneg %p240
        %s350 = sand.u32 %s230, 1
        %s351 = scalar_lea.sflag [#allocation4], %s350
        %s352 = sand.u32 %s230, 1
        %s353 = smul.addr %s352, 8
        %s354 = scalar_lea.vmem [#allocation3], %s353
        %p355 = pneg %p269
        %p356 = pneg %p266
        %s357 = sand.u32 %s256, 1
        %s358 = scalar_lea.sflag [#allocation6], %s357
        %s359 = sand.u32 %s256, 1
        %s360 = smul.addr %s359, 32
        %s361 = scalar_lea.vmem [#allocation5], %s360
        %p362 = scmp.lt.s32.totalorder %s28, 1
        %s363 = scalar_select %p362, %s28, 1
        %s364 = smul.addr %s363, 8
        %s365 = scalar_lea.vmem %s0, %s364
        %v366 = vld [vmem:[%s365] sm:$0xff]
        %v367 = vld [vmem:[%s1] sm:$0x1]
        %v368 = vld [vmem:[%s2] sm:$0x1]
        %vm369 = vcmask 261120
        %v370 = vsel %vm369, %v366, 0.0
        %371 = vadd.xlane.f32.xlu0 %v370
        %v372 = vpop.xlane.xlu0 %371
        %v373 = vrcp.pop 32.0
        %v374 = vmul.f32 32.0, %v373
        %v375 = vsub.f32 1.0, %v374
        %v376 = vmul.f32 %v373, %v375
        %v377 = vadd.f32 %v373, %v376
        %vm378 = vweird.f32 %v373
        %v379 = vsel %vm378, %v373, %v377
        %v380 = vmul.f32 %v372, %v379
        %v381 = vsub.f32 %v366, %v380
        %v382 = vmul.f32 %v381, %v381
        %v383 = vsel %vm369, %v382, 0.0
        %384 = vadd.xlane.f32.xlu0 %v383
        %v385 = vpop.xlane.xlu0 %384
        %v386 = vmul.f32 %v385, %v379
        %v387 = vadd.f32 %v386, 1e-05
        %v388 = vrsqrt.pop %v387
        %v389 = vmul.f32 %v388, %v387
        %v390 = vmul.f32 %v389, %v388
        %v391 = vmul.f32 0.5, %v390
        %v392 = vsub.f32 1.5, %v391
        %v393 = vmul.f32 %v388, %v392
        %vm394 = vweird.f32 %v387
        %vm395 = vweird.f32 %v388
        %vm396 = vmor %vm394, %vm395
        %v397 = vsel %vm396, %v388, %v393
        %v398 = vmul.f32 %v381, %v397
        %v400 = vperm.slane %v367, 0
        %v402 = vmul.f32 %v398, %v400
        %v404 = vperm.slane %v368, 0
        %v406 = vadd.f32 %v402, %v404
        %v407 = vld [vmem:[%s3] sm:$0xff]
        %v408 = vld [vmem:[%s3 + $0x8] sm:$0xff]
        %v409 = vld [vmem:[%s3 + $0x10] sm:$0xff]
        %v410 = vld [vmem:[%s3 + $0x18] sm:$0xff]
        %v411 = vld [vmem:[%s4] sm:$0x1]
        %v413 = vperm.slane %v411, 0
        %v416 = vsel %vm369, %v406, 0
        %418 = vmatpush.msra.mxu0 0.0
        %419 = vmatpush.msra.mxu0 0.0
        %420 = vmatpush.msra.mxu0 0.0
        %421 = vmatpush.msra.mxu0 0.0
        %422 = vmatpush.msra.mxu0 0.0
        %423 = vmatpush.msra.mxu0 0.0
        %424 = vmatpush.msra.mxu0 0.0
        %425 = vmatpush.msra.mxu0 0.0
        %426 = vmatpush.msra.mxu0 0.0
        %427 = vmatpush.msra.mxu0 0.0
        %428 = vmatpush.msra.mxu0 0.0
        %429 = vmatpush.msra.mxu0 0.0
        %430 = vmatpush.msra.mxu0 %v410
        %431 = vmatpush.msra.mxu0 %v409
        %432 = vmatpush.msra.mxu0 %v408
        %433 = vmatpush.msra.mxu0 %v407
        %434 = vmatmul.f32.gmra.mxu0 %v416
        %v435 = vpop.f32.mrf.mxu0
        %v436 = vadd.f32 %v413, %v435
        %437 = vdwg.mxu0
        %439 = vrot.lane.b32.xlu0 %v436, 96
        %v440 = vpop.permute.xlu0 %439
        %vm441 = vcmask 64512
        %v442 = vsel %vm441, %v436, 0
        %v444 = vsel %vm441, %v440, 0
        %446 = vmatpush.xpose.msra.mxu0 0.0
        %447 = vmatpush.xpose.msra.mxu0 0.0
        %448 = vmatpush.xpose.msra.mxu0 0.0
        %449 = vmatpush.xpose.msra.mxu0 0.0
        %450 = vmatpush.xpose.msra.mxu0 0.0
        %451 = vmatpush.xpose.msra.mxu0 0.0
        %452 = vmatpush.xpose.msra.mxu0 0.0
        %453 = vmatpush.xpose.msra.mxu0 0.0
        %454 = vmatpush.xpose.msra.mxu0 0.0
        %455 = vmatpush.xpose.msra.mxu0 0.0
        %456 = vmatpush.xpose.msra.mxu0 0.0
        %457 = vmatpush.xpose.msra.mxu0 0.0
        %458 = vmatpush.xpose.msra.mxu0 0.0
        %459 = vmatpush.xpose.msra.mxu0 0.0
        %460 = vmatpush.xpose.msra.mxu0 0.0
        %461 = vmatpush.xpose.msra.mxu0 %v444
        %462 = vmatmul.f32.gmra.mxu0 %v442
        %v463 = vpop.f32.mrf.mxu0
        %v464 = vadd.f32 0.0, %v463
        %465 = vdwg.mxu0
        %v466 = vmul.f32 %v464, 0.35355338
        %v467 = vsel %vm441, %v466, -inf
        %468 = vmax.xlane.f32.xlu0 %v467
        %v469 = vpop.xlane.xlu0 %468
        %v470 = vsub.f32 %v466, %v469
        %v471 = vmul.f32 %v470, 1.442695
        %v472 = vpow.pop %v471
        %v473 = vsel %vm441, %v472, 0.0
        %474 = vadd.xlane.f32.xlu0 %v473
        %v475 = vpop.xlane.xlu0 %474
        %v476 = vrcp.pop %v475
        %v477 = vmul.f32 %v472, %v476
        %478 = vst.msk [vmem:[%s361] sm:$0xff] %vm441, %v477
        %479 = vrot.lane.b32.xlu0 %v436, 64
        %v480 = vpop.permute.xlu0 %479
        %v483 = vsel %vm441, %v477, 0
        %485 = vmatpush.msra.mxu0 0.0
        %486 = vmatpush.msra.mxu0 0.0
        %487 = vmatpush.msra.mxu0 0.0
        %488 = vmatpush.msra.mxu0 0.0
        %489 = vmatpush.msra.mxu0 0.0
        %490 = vmatpush.msra.mxu0 0.0
        %491 = vmatpush.msra.mxu0 0.0
        %492 = vmatpush.msra.mxu0 0.0
        %493 = vmatpush.msra.mxu0 0.0
        %494 = vmatpush.msra.mxu0 0.0
        %495 = vmatpush.msra.mxu0 0.0
        %496 = vmatpush.msra.mxu0 0.0
        %497 = vmatpush.msra.mxu0 0.0
        %498 = vmatpush.msra.mxu0 0.0
        %499 = vmatpush.msra.mxu0 0.0
        %500 = vmatpush.msra.mxu0 %v480
        %501 = vmatmul.f32.gmra.mxu0 %v483
        %v502 = vpop.f32.mrf.mxu0
        %v503 = vadd.f32 0.0, %v502
        %504 = vdwg.mxu0
        %505 = vst.msk [vmem:[#allocation2] sm:$0xff] %vm441, %v503
        %506 = vrot.lane.b32.xlu0 %v436, 120
        %v507 = vpop.permute.xlu0 %506
        %508 = vrot.lane.b32.xlu0 %v436, 88
        %v509 = vpop.permute.xlu0 %508
        %v510 = vsel %vm441, %v507, 0
        %v512 = vsel %vm441, %v509, 0
        %514 = vmatpush.xpose.msra.mxu0 0.0
        %515 = vmatpush.xpose.msra.mxu0 0.0
        %516 = vmatpush.xpose.msra.mxu0 0.0
        %517 = vmatpush.xpose.msra.mxu0 0.0
        %518 = vmatpush.xpose.msra.mxu0 0.0
        %519 = vmatpush.xpose.msra.mxu0 0.0
        %520 = vmatpush.xpose.msra.mxu0 0.0
        %521 = vmatpush.xpose.msra.mxu0 0.0
        %522 = vmatpush.xpose.msra.mxu0 0.0
        %523 = vmatpush.xpose.msra.mxu0 0.0
        %524 = vmatpush.xpose.msra.mxu0 0.0
        %525 = vmatpush.xpose.msra.mxu0 0.0
        %526 = vmatpush.xpose.msra.mxu0 0.0
        %527 = vmatpush.xpose.msra.mxu0 0.0
        %528 = vmatpush.xpose.msra.mxu0 0.0
        %529 = vmatpush.xpose.msra.mxu0 %v512
        %530 = vmatmul.f32.gmra.mxu0 %v510
        %v531 = vpop.f32.mrf.mxu0
        %v532 = vadd.f32 0.0, %v531
        %533 = vdwg.mxu0
        %v534 = vmul.f32 %v532, 0.35355338
        %v535 = vsel %vm441, %v534, -inf
        %536 = vmax.xlane.f32.xlu0 %v535
        %v537 = vpop.xlane.xlu0 %536
        %v538 = vsub.f32 %v534, %v537
        %v539 = vmul.f32 %v538, 1.442695
        %v540 = vpow.pop %v539
        %v541 = vsel %vm441, %v540, 0.0
        %542 = vadd.xlane.f32.xlu0 %v541
        %v543 = vpop.xlane.xlu0 %542
        %v544 = vrcp.pop %v543
        %v545 = vmul.f32 %v540, %v544
        %s546 = scalar_lea.vmem %s361, 8 [#allocation5]
        %547 = vst.msk [vmem:[%s546] sm:$0xff] %vm441, %v545
        %548 = vrot.lane.b32.xlu0 %v436, 56
        %v549 = vpop.permute.xlu0 %548
        %v552 = vsel %vm441, %v545, 0
        %554 = vmatpush.msra.mxu0 0.0
        %555 = vmatpush.msra.mxu0 0.0
        %556 = vmatpush.msra.mxu0 0.0
        %557 = vmatpush.msra.mxu0 0.0
        %558 = vmatpush.msra.mxu0 0.0
        %559 = vmatpush.msra.mxu0 0.0
        %560 = vmatpush.msra.mxu0 0.0
        %561 = vmatpush.msra.mxu0 0.0
        %562 = vmatpush.msra.mxu0 0.0
        %563 = vmatpush.msra.mxu0 0.0
        %564 = vmatpush.msra.mxu0 0.0
        %565 = vmatpush.msra.mxu0 0.0
        %566 = vmatpush.msra.mxu0 0.0
        %567 = vmatpush.msra.mxu0 0.0
        %568 = vmatpush.msra.mxu0 0.0
        %569 = vmatpush.msra.mxu0 %v549
        %570 = vmatmul.f32.gmra.mxu0 %v552
        %v571 = vpop.f32.mrf.mxu0
        %v572 = vadd.f32 0.0, %v571
        %573 = vdwg.mxu0
        %575 = vrot.lane.b32.xlu0 %v572, 8
        %v576 = vpop.permute.xlu0 %575
        %vm578 = vcmask 130112
        %579 = vst.msk [vmem:[#allocation2] sm:$0xff] %vm578, %v576
        %580 = vrot.lane.b32.xlu0 %v436, 112
        %v581 = vpop.permute.xlu0 %580
        %582 = vrot.lane.b32.xlu0 %v436, 80
        %v583 = vpop.permute.xlu0 %582
        %v584 = vsel %vm441, %v581, 0
        %v586 = vsel %vm441, %v583, 0
        %588 = vmatpush.xpose.msra.mxu0 0.0
        %589 = vmatpush.xpose.msra.mxu0 0.0
        %590 = vmatpush.xpose.msra.mxu0 0.0
        %591 = vmatpush.xpose.msra.mxu0 0.0
        %592 = vmatpush.xpose.msra.mxu0 0.0
        %593 = vmatpush.xpose.msra.mxu0 0.0
        %594 = vmatpush.xpose.msra.mxu0 0.0
        %595 = vmatpush.xpose.msra.mxu0 0.0
        %596 = vmatpush.xpose.msra.mxu0 0.0
        %597 = vmatpush.xpose.msra.mxu0 0.0
        %598 = vmatpush.xpose.msra.mxu0 0.0
        %599 = vmatpush.xpose.msra.mxu0 0.0
        %600 = vmatpush.xpose.msra.mxu0 0.0
        %601 = vmatpush.xpose.msra.mxu0 0.0
        %602 = vmatpush.xpose.msra.mxu0 0.0
        %603 = vmatpush.xpose.msra.mxu0 %v586
        %604 = vmatmul.f32.gmra.mxu0 %v584
        %v605 = vpop.f32.mrf.mxu0
        %v606 = vadd.f32 0.0, %v605
        %607 = vdwg.mxu0
        %v608 = vmul.f32 %v606, 0.35355338
        %v609 = vsel %vm441, %v608, -inf
        %610 = vmax.xlane.f32.xlu0 %v609
        %v611 = vpop.xlane.xlu0 %610
        %v612 = vsub.f32 %v608, %v611
        %v613 = vmul.f32 %v612, 1.442695
        %v614 = vpow.pop %v613
        %v615 = vsel %vm441, %v614, 0.0
        %616 = vadd.xlane.f32.xlu0 %v615
        %v617 = vpop.xlane.xlu0 %616
        %v618 = vrcp.pop %v617
        %v619 = vmul.f32 %v614, %v618
        %s620 = scalar_lea.vmem %s361, 16 [#allocation5]
        %621 = vst.msk [vmem:[%s620] sm:$0xff] %vm441, %v619
        %622 = vrot.lane.b32.xlu0 %v436, 48
        %v623 = vpop.permute.xlu0 %622
        %v626 = vsel %vm441, %v619, 0
        %628 = vmatpush.msra.mxu0 0.0
        %629 = vmatpush.msra.mxu0 0.0
        %630 = vmatpush.msra.mxu0 0.0
        %631 = vmatpush.msra.mxu0 0.0
        %632 = vmatpush.msra.mxu0 0.0
        %633 = vmatpush.msra.mxu0 0.0
        %634 = vmatpush.msra.mxu0 0.0
        %635 = vmatpush.msra.mxu0 0.0
        %636 = vmatpush.msra.mxu0 0.0
        %637 = vmatpush.msra.mxu0 0.0
        %638 = vmatpush.msra.mxu0 0.0
        %639 = vmatpush.msra.mxu0 0.0
        %640 = vmatpush.msra.mxu0 0.0
        %641 = vmatpush.msra.mxu0 0.0
        %642 = vmatpush.msra.mxu0 0.0
        %643 = vmatpush.msra.mxu0 %v623
        %644 = vmatmul.f32.gmra.mxu0 %v626
        %v645 = vpop.f32.mrf.mxu0
        %v646 = vadd.f32 0.0, %v645
        %647 = vdwg.mxu0
        %649 = vrot.lane.b32.xlu0 %v646, 16
        %v650 = vpop.permute.xlu0 %649
        %vm652 = vcmask 195712
        %653 = vst.msk [vmem:[#allocation2] sm:$0xff] %vm652, %v650
        %654 = vrot.lane.b32.xlu0 %v436, 104
        %v655 = vpop.permute.xlu0 %654
        %656 = vrot.lane.b32.xlu0 %v436, 72
        %v657 = vpop.permute.xlu0 %656
        %v658 = vsel %vm441, %v655, 0
        %v660 = vsel %vm441, %v657, 0
        %662 = vmatpush.xpose.msra.mxu0 0.0
        %663 = vmatpush.xpose.msra.mxu0 0.0
        %664 = vmatpush.xpose.msra.mxu0 0.0
        %665 = vmatpush.xpose.msra.mxu0 0.0
        %666 = vmatpush.xpose.msra.mxu0 0.0
        %667 = vmatpush.xpose.msra.mxu0 0.0
        %668 = vmatpush.xpose.msra.mxu0 0.0
        %669 = vmatpush.xpose.msra.mxu0 0.0
        %670 = vmatpush.xpose.msra.mxu0 0.0
        %671 = vmatpush.xpose.msra.mxu0 0.0
        %672 = vmatpush.xpose.msra.mxu0 0.0
        %673 = vmatpush.xpose.msra.mxu0 0.0
        %674 = vmatpush.xpose.msra.mxu0 0.0
        %675 = vmatpush.xpose.msra.mxu0 0.0
        %676 = vmatpush.xpose.msra.mxu0 0.0
        %677 = vmatpush.xpose.msra.mxu0 %v660
        %678 = vmatmul.f32.gmra.mxu0 %v658
        %v679 = vpop.f32.mrf.mxu0
        %v680 = vadd.f32 0.0, %v679
        %681 = vdwg.mxu0
        %v682 = vmul.f32 %v680, 0.35355338
        %v683 = vsel %vm441, %v682, -inf
        %684 = vmax.xlane.f32.xlu0 %v683
        %v685 = vpop.xlane.xlu0 %684
        %v686 = vsub.f32 %v682, %v685
        %v687 = vmul.f32 %v686, 1.442695
        %v688 = vpow.pop %v687
        %v689 = vsel %vm441, %v688, 0.0
        %690 = vadd.xlane.f32.xlu0 %v689
        %v691 = vpop.xlane.xlu0 %690
        %v692 = vrcp.pop %v691
        %v693 = vmul.f32 %v688, %v692
        %s694 = scalar_lea.vmem %s361, 24 [#allocation5]
        %695 = vst.msk [vmem:[%s694] sm:$0xff] %vm441, %v693
        %696 = vrot.lane.b32.xlu0 %v436, 40
        %v697 = vpop.permute.xlu0 %696
        %v700 = vsel %vm441, %v693, 0
        %702 = vmatpush.msra.mxu0 0.0
        %703 = vmatpush.msra.mxu0 0.0
        %704 = vmatpush.msra.mxu0 0.0
        %705 = vmatpush.msra.mxu0 0.0
        %706 = vmatpush.msra.mxu0 0.0
        %707 = vmatpush.msra.mxu0 0.0
        %708 = vmatpush.msra.mxu0 0.0
        %709 = vmatpush.msra.mxu0 0.0
        %710 = vmatpush.msra.mxu0 0.0
        %711 = vmatpush.msra.mxu0 0.0
        %712 = vmatpush.msra.mxu0 0.0
        %713 = vmatpush.msra.mxu0 0.0
        %714 = vmatpush.msra.mxu0 0.0
        %715 = vmatpush.msra.mxu0 0.0
        %716 = vmatpush.msra.mxu0 0.0
        %717 = vmatpush.msra.mxu0 %v697
        %718 = vmatmul.f32.gmra.mxu0 %v700
        %v719 = vpop.f32.mrf.mxu0
        %v720 = vadd.f32 0.0, %v719
        %721 = vdwg.mxu0
        %723 = vrot.lane.b32.xlu0 %v720, 24
        %v724 = vpop.permute.xlu0 %723
        %vm726 = vcmask 261312
        %727 = vst.msk [vmem:[#allocation2] sm:$0xff] %vm726, %v724
        %v728 = vld [vmem:[#allocation2] sm:$0xff]
        %v729 = vadd.f32 %v366, %v728
        %v730 = vsel %vm369, %v729, 0.0
        %731 = vadd.xlane.f32.xlu0 %v730
        %v732 = vpop.xlane.xlu0 %731
        %v733 = vmul.f32 %v732, %v379
        %v734 = vsub.f32 %v729, %v733
        %v735 = vmul.f32 %v734, %v734
        %v736 = vsel %vm369, %v735, 0.0
        %737 = vadd.xlane.f32.xlu0 %v736
        %v738 = vpop.xlane.xlu0 %737
        %v739 = vmul.f32 %v738, %v379
        %v740 = vadd.f32 %v739, 1e-05
        %v741 = vrsqrt.pop %v740
        %v742 = vmul.f32 %v741, %v740
        %v743 = vmul.f32 %v742, %v741
        %v744 = vmul.f32 0.5, %v743
        %v745 = vsub.f32 1.5, %v744
        %v746 = vmul.f32 %v741, %v745
        %vm747 = vweird.f32 %v740
        %vm748 = vweird.f32 %v741
        %vm749 = vmor %vm747, %vm748
        %v750 = vsel %vm749, %v741, %v746
        %v751 = vmul.f32 %v734, %v750
        %v752 = vmul.f32 %v751, %v400
        %v753 = vadd.f32 %v752, %v404
        %v754 = vld [vmem:[%s5] sm:$0xff]
        %v755 = vld [vmem:[%s5 + $0x8] sm:$0xff]
        %v756 = vld [vmem:[%s5 + $0x10] sm:$0xff]
        %v757 = vld [vmem:[%s5 + $0x18] sm:$0xff]
        %v758 = vld [vmem:[%s6] sm:$0x1]
        %v760 = vperm.slane %v758, 0
        %v763 = vsel %vm369, %v753, 0
        %765 = vmatpush.msra.mxu0 0.0
        %766 = vmatpush.msra.mxu0 0.0
        %767 = vmatpush.msra.mxu0 0.0
        %768 = vmatpush.msra.mxu0 0.0
        %769 = vmatpush.msra.mxu0 0.0
        %770 = vmatpush.msra.mxu0 0.0
        %771 = vmatpush.msra.mxu0 0.0
        %772 = vmatpush.msra.mxu0 0.0
        %773 = vmatpush.msra.mxu0 0.0
        %774 = vmatpush.msra.mxu0 0.0
        %775 = vmatpush.msra.mxu0 0.0
        %776 = vmatpush.msra.mxu0 0.0
        %777 = vmatpush.msra.mxu0 %v757
        %778 = vmatpush.msra.mxu0 %v756
        %779 = vmatpush.msra.mxu0 %v755
        %780 = vmatpush.msra.mxu0 %v754
        %781 = vmatmul.f32.gmra.mxu0 %v763
        %v782 = vpop.f32.mrf.mxu0
        %v783 = vadd.f32 %v760, %v782
        %784 = vdwg.mxu0
        %v785 = vmul.f32 %v783, 0.5
        %v786 = vmul.f32 %v783, 0.044715
        %v787 = vmul.f32 %v786, %v783
        %v788 = vmul.f32 %v787, %v783
        %v789 = vadd.f32 %v783, %v788
        %v790 = vmul.f32 %v789, 0.7978846
        %v791 = vtanh.pop %v790
        %v792 = vadd.f32 %v791, 1.0
        %v793 = vmul.f32 %v785, %v792
        %v794 = vld [vmem:[%s7] sm:$0xff]
        %v795 = vld [vmem:[%s7 + $0x8] sm:$0xff]
        %v796 = vld [vmem:[%s7 + $0x10] sm:$0xff]
        %v797 = vld [vmem:[%s7 + $0x18] sm:$0xff]
        %v798 = vld [vmem:[%s7 + $0x20] sm:$0xff]
        %v799 = vld [vmem:[%s7 + $0x28] sm:$0xff]
        %v800 = vld [vmem:[%s7 + $0x30] sm:$0xff]
        %v801 = vld [vmem:[%s7 + $0x38] sm:$0xff]
        %v802 = vld [vmem:[%s7 + $0x40] sm:$0xff]
        %v803 = vld [vmem:[%s7 + $0x48] sm:$0xff]
        %v804 = vld [vmem:[%s7 + $0x50] sm:$0xff]
        %v805 = vld [vmem:[%s7 + $0x58] sm:$0xff]
        %v806 = vld [vmem:[%s7 + $0x60] sm:$0xff]
        %v807 = vld [vmem:[%s7 + $0x68] sm:$0xff]
        %v808 = vld [vmem:[%s7 + $0x70] sm:$0xff]
        %v809 = vld [vmem:[%s7 + $0x78] sm:$0xff]
        %v810 = vld [vmem:[%s8] sm:$0x1]
        %v812 = vperm.slane %v810, 0
        %814 = vmatpush.msra.mxu0 %v809
        %815 = vmatpush.msra.mxu0 %v808
        %816 = vmatpush.msra.mxu0 %v807
        %817 = vmatpush.msra.mxu0 %v806
        %818 = vmatpush.msra.mxu0 %v805
        %819 = vmatpush.msra.mxu0 %v804
        %820 = vmatpush.msra.mxu0 %v803
        %821 = vmatpush.msra.mxu0 %v802
        %822 = vmatpush.msra.mxu0 %v801
        %823 = vmatpush.msra.mxu0 %v800
        %824 = vmatpush.msra.mxu0 %v799
        %825 = vmatpush.msra.mxu0 %v798
        %826 = vmatpush.msra.mxu0 %v797
        %827 = vmatpush.msra.mxu0 %v796
        %828 = vmatpush.msra.mxu0 %v795
        %829 = vmatpush.msra.mxu0 %v794
        %830 = vmatmul.f32.gmra.mxu0 %v793
        %v831 = vpop.f32.mrf.mxu0
        %v832 = vadd.f32 %v812, %v831
        %833 = vdwg.mxu0
        %v834 = vadd.f32 %v729, %v832
        %835 = vst.msk [vmem:[%s354] sm:$0xff] %vm369, %v834
        %s836 = sand.u32 %s230, 1
        %s837 = scalar_lea.sflag [#allocation4], %s836
        %s838 = sand.u32 %s230, 1
        %s839 = smul.addr %s838, 8
        %s840 = scalar_lea.vmem [#allocation3], %s839
        %s841 = sand.u32 %s256, 1
        %s842 = scalar_lea.sflag [#allocation6], %s841
        %s843 = sand.u32 %s256, 1
        %s844 = smul.addr %s843, 32
        %s845 = scalar_lea.vmem [#allocation5], %s844
        // Predicated region
        $region57: #{tpu_custom_call.1} parent=55 // pred_check
          %p846 = pneg %p240
        $region58: #{tpu_custom_call.1} parent=55 // pred_check_branch
          %848 = sbr.rel (%p846) target = $region60
        $region59: #{tpu_custom_call.1} parent=55 // pred_region
          %850 = vsyncadd %s837, 0
          %s851 = smul.addr %s28, 8
          %s852 = scalar_lea.hbm %s9, %s851
          %s854 = sshll.u32 %s840, 4
          %s855 = int_to_ptr.vmem [resolvable:$true] %s854
          %s856 = sshll.u32 %s852, 4
          %s857 = int_to_ptr.hbm [resolvable:$true] %s856
          %859 = dma.vmem_to_hbm [thread:$0]  %s855, 128, %s857, %s837
        $region60: #{tpu_custom_call.1} parent=55 // pred_fallthru
          _
        // Predicated region
        $region61: #{tpu_custom_call.1} parent=55 // pred_check
          %p860 = pneg %p266
        $region62: #{tpu_custom_call.1} parent=55 // pred_check_branch
          %862 = sbr.rel (%p860) target = $region64
        $region63: #{tpu_custom_call.1} parent=55 // pred_region
          %864 = vsyncadd %s842, 0
          %s865 = smul.addr %s28, 4
          %s866 = smul.addr %s865, 8
          %s867 = scalar_lea.hbm %s10, %s866
          %s868 = sshll.u32 %s845, 4
          %s869 = int_to_ptr.vmem [resolvable:$true] %s868
          %s870 = sshll.u32 %s867, 4
          %s871 = int_to_ptr.hbm [resolvable:$true] %s870
          %876 = dma.vmem_to_hbm [thread:$0]  %s869, 512, %s871, %s842, 128, 128, 8
        $region64: #{tpu_custom_call.1} parent=55 // pred_fallthru
          _
      $region56: #{tpu_custom_call.1} parent=5 // pred_fallthru
        _
      %p877 = scmp.le.s32.totalorder 2, %s23
      // Predicated region
      $region65: #{tpu_custom_call.1} parent=5 // pred_check
        %p878 = pneg %p877
      $region66: #{tpu_custom_call.1} parent=5 // pred_check_branch
        %880 = sbr.rel (%p878) target = $region68
      $region67: #{tpu_custom_call.1} parent=5 // pred_region
        %s881 = ssub.s32 %s23, 2
        // Predicated region
        $region69: #{tpu_custom_call.1} parent=67 // pred_check
          %p882 = pneg %p246
        $region70: #{tpu_custom_call.1} parent=67 // pred_check_branch
          %884 = sbr.rel (%p882) target = $region72
        $region71: #{tpu_custom_call.1} parent=67 // pred_region
          %s885 = sand.u32 %s231, 1
          %s886 = scalar_lea.sflag [#allocation4], %s885
          %s887 = sand.u32 %s231, 1
          %s888 = smul.addr %s887, 8
          %s889 = scalar_lea.vmem [#allocation3], %s888
          %891 = dma.done %s886, 128
        $region72: #{tpu_custom_call.1} parent=67 // pred_fallthru
          _
        // Predicated region
        $region73: #{tpu_custom_call.1} parent=67 // pred_check
          %p892 = pneg %p272
        $region74: #{tpu_custom_call.1} parent=67 // pred_check_branch
          %894 = sbr.rel (%p892) target = $region76
        $region75: #{tpu_custom_call.1} parent=67 // pred_region
          %s895 = sand.u32 %s257, 1
          %s896 = scalar_lea.sflag [#allocation6], %s895
          %s897 = sand.u32 %s257, 1
          %s898 = smul.addr %s897, 32
          %s899 = scalar_lea.vmem [#allocation5], %s898
          %901 = dma.done %s896, 512
        $region76: #{tpu_custom_call.1} parent=67 // pred_fallthru
          _
      $region68: #{tpu_custom_call.1} parent=5 // pred_fallthru
        _
    $region6: #{tpu_custom_call.1} parent=1 // loop_footer
      %s27 = sadd.s32 1, %s23
    $region7: #{tpu_custom_call.1} parent=1 // loop_footer_branch
      %22 = sbr.rel target = $region3
    $region8: #{tpu_custom_call.1} parent=1 // loop_exit
      _
    %902 = vsyncpa [#allocation4], 1
    %s903 = scalar_lea.sflag [#allocation4], 1
    %904 = vsyncpa %s903, 1
    %905 = vsyncpa [#allocation6], 1
    %s906 = scalar_lea.sflag [#allocation6], 1
    %907 = vsyncpa %s906, 1

</llo_original>
